<compile_context>
chip_gen: v5e
topology: v5e:2x2
jax: 0.10.0
libtpu: 0.0.40
codegen_flags: <defaults>
</compile_context>

<pallas_src>
import jax
import jax.numpy as jnp
import numpy as np
from jax.experimental import pallas as pl
from jax.experimental.pallas import tpu as pltpu


def _sigmoid(x):
    return 1.0 / (1.0 + jnp.exp(-x))


def _senet_kernel(e_ref, w1e_ref, w2_ref, bcast_ref, out_ref):
    # e_ref:     [TB, F*K]   lane-dense slab of TB samples
    # w1e_ref:   [F*K, Rd]   first linear layer with the field-sum folded in
    # w2_ref:    [Rd, F]     second linear layer
    # bcast_ref: [F, F*K]    constant 0/1 matrix replicating field f over its K lanes
    # out_ref:   [TB, F*K]
    e = e_ref[...].astype(jnp.float32)                                  # [TB, F*K]
    h1 = _sigmoid(jnp.dot(e, w1e_ref[...],
                          preferred_element_type=jnp.float32))          # [TB, Rd]
    h2 = _sigmoid(jnp.dot(h1, w2_ref[...],
                          preferred_element_type=jnp.float32))          # [TB, F]
    scale = jnp.dot(h2, bcast_ref[...],
                    preferred_element_type=jnp.float32)                 # [TB, F*K]
    out_ref[...] = (e * scale).astype(out_ref.dtype)


def precompute_kernel_weights(W1, W2, K):
    """Build grid-invariant kernel constants ONCE (not per forward call).

    W1: [F, Rd], W2: [Rd, F]  ->  (w1_eff [F*K, Rd], W2 f32, bcast [F, F*K])
    """
    F = W1.shape[0]
    # Fold the squeeze (sum over K) into the first linear layer:
    #   sum_k e[b,f,k] * W1[f,r]  ==  (e2d @ repeat(W1, K, axis=0))[b, r]
    w1_eff = jnp.repeat(W1.astype(jnp.float32), K, axis=0)              # [F*K, Rd]
    # 0/1 matrix replicating each field's excitation across its K lanes.
    bcast = jnp.repeat(jnp.eye(F, dtype=jnp.float32), K, axis=1)        # [F, F*K]
    return w1_eff, W2.astype(jnp.float32), bcast


def _pick_tb(B, block_b):
    """Batch tile: multiple of 8 (or == B), capped so cdiv(B, TB) >= 2 when B > 8
    (keeps both v7x TensorCores busy under the 'parallel' batch axis)."""
    if B <= 8:
        return B                               # full dim -> block constraint satisfied
    half_up8 = ((-(-B // 2)) + 7) // 8 * 8     # round_up(cdiv(B, 2), 8)
    tb = min(block_b, half_up8)
    return max(8, (tb // 8) * 8)


def senet_forward(e, kernel_weights, *, block_b=2048):
    """e: [B, F, K]; kernel_weights = precompute_kernel_weights(W1, W2, K)."""
    B, F, K = e.shape
    w1_eff, w2f, bcast = kernel_weights
    Rd = w1_eff.shape[1]
    FK = F * K

    TB = _pick_tb(B, block_b)
    n_blocks = pl.cdiv(B, TB)

    e2d = e.reshape(B, FK)                     # lane-dense slab, no pad / no copy
    itemsize = np.dtype(e.dtype).itemsize

    cost = pl.CostEstimate(
        flops=2 * B * (FK * Rd + Rd * F + F * FK),
        transcendentals=B * (Rd + F),
        bytes_accessed=2 * B * FK * itemsize + (FK * Rd + Rd * F + F * FK) * 4,
    )

    out2d = pl.pallas_call(
        _senet_kernel,
        out_shape=jax.ShapeDtypeStruct((B, FK), e.dtype),
        grid_spec=pltpu.PrefetchScalarGridSpec(
            num_scalar_prefetch=0,
            grid=(n_blocks,),
            in_specs=[
                pl.BlockSpec((TB, FK), lambda b: (b, 0)),   # e slab
                pl.BlockSpec((FK, Rd), lambda b: (0, 0)),   # folded W1, VMEM-resident
                pl.BlockSpec((Rd, F), lambda b: (0, 0)),    # W2
                pl.BlockSpec((F, FK), lambda b: (0, 0)),    # broadcast matrix
            ],
            out_specs=pl.BlockSpec((TB, FK), lambda b: (b, 0)),
        ),
        compiler_params=pltpu.CompilerParams(
            dimension_semantics=("parallel",)),
        cost_estimate=cost,
    )(e2d, w1_eff, w2f, bcast)

    return out2d.reshape(B, F, K)


def _reference(e, W1, W2):
    # Pure-JAX reference reproducing the PyTorch SENet forward (sigmoid acts).
    h_fsq = jnp.sum(e, axis=2)                      # [B, F]
    h1 = _sigmoid(h_fsq @ W1)                       # [B, Rd]
    h2 = _sigmoid(h1 @ W2)                          # [B, F]
    return e * h2[:, :, None]                       # [B, F, K]


def make_params(fields_num, reduction_ratio, key):
    F = fields_num
    Rd = max(1, int(F / reduction_ratio))
    k1, k2 = jax.random.split(key)
    # Deterministic Xavier-uniform-style init. Weights stored pre-transposed
    # relative to nn.Linear (forward is x @ W rather than x @ W.T).
    b1 = float(np.sqrt(6.0 / (F + Rd)))
    W1 = jax.random.uniform(k1, (F, Rd), jnp.float32, -b1, b1)
    b2 = float(np.sqrt(6.0 / (Rd + F)))
    W2 = jax.random.uniform(k2, (Rd, F), jnp.float32, -b2, b2)
    return W1, W2


if __name__ == "__main__":
    F, K, R = 8, 32, 2      # fields_num, emb_dim, reduction_ratio
    key = jax.random.PRNGKey(0)
    k_e, k_w, k_e2 = jax.random.split(key, 3)
    W1, W2 = make_params(F, R, k_w)
    kw = precompute_kernel_weights(W1, W2, K)

    # Case 1: small batch, single full-dim block.
    B = 8
    e = jax.random.normal(k_e, (B, F, K), dtype=jnp.float32)
    out = jax.block_until_ready(senet_forward(e, kw))
    ref = _reference(e, W1, W2)
    assert out.shape == (B, F, K), out.shape
    assert jnp.allclose(out, ref, atol=1e-5, rtol=1e-5), "mismatch vs reference (B=8)"

    # Case 2: batch not a multiple of the tile -> exercises Pallas partial-block
    # clipping (no host-side pad / slice).
    B2 = 20
    e2 = jax.random.normal(k_e2, (B2, F, K), dtype=jnp.float32)
    out2 = jax.block_until_ready(senet_forward(e2, kw, block_b=8))
    ref2 = _reference(e2, W1, W2)
    assert out2.shape == (B2, F, K), out2.shape
    assert jnp.allclose(out2, ref2, atol=1e-5, rtol=1e-5), "mismatch vs reference (B=20)"

    print("KERNEL_OK")
</pallas_src>

<mosaic_0001>
module attributes {stable_mosaic.version = 11 : i64} {
  func.func @_senet_kernel(%arg0: i32, %arg1: memref<8x256xf32, #tpu.memory_space<vmem>>, %arg2: memref<256x4xf32, #tpu.memory_space<vmem>>, %arg3: memref<4x8xf32, #tpu.memory_space<vmem>>, %arg4: memref<8x256xf32, #tpu.memory_space<vmem>>, %arg5: memref<8x256xf32, #tpu.memory_space<vmem>>) attributes {dimension_semantics = [#tpu.dimension_semantics<parallel>], iteration_bounds = array<i64: 1>, scalar_prefetch = 0 : i64, scratch_operands = 0 : i64, tpu.core_type = #tpu.core_type<tc>, window_params = [{transform_indices = @transform_0, window_bounds = array<i64: 8, 256>}, {pipeline_mode = #tpu.pipeline_mode<synchronous>, transform_indices = @transform_1, window_bounds = array<i64: 256, 4>}, {pipeline_mode = #tpu.pipeline_mode<synchronous>, transform_indices = @transform_2, window_bounds = array<i64: 4, 8>}, {pipeline_mode = #tpu.pipeline_mode<synchronous>, transform_indices = @transform_3, window_bounds = array<i64: 8, 256>}, {transform_indices = @transform_4, window_bounds = array<i64: 8, 256>}]} {
    %c0 = arith.constant 0 : index
    %c0_0 = arith.constant 0 : index
    %0 = vector.load %arg1[%c0, %c0_0] : memref<8x256xf32, #tpu.memory_space<vmem>>, vector<8x256xf32>
    %c0_1 = arith.constant 0 : index
    %c0_2 = arith.constant 0 : index
    %1 = vector.load %arg2[%c0_1, %c0_2] : memref<256x4xf32, #tpu.memory_space<vmem>>, vector<256x4xf32>
    %cst = arith.constant dense<0.000000e+00> : vector<8x4xf32>
    %2 = tpu.matmul %0, %1, %cst {dimension_numbers = #tpu.dot_dimension_numbers<[1], [0], [0], [1], [0, 0, 1, 1], [], []>} : vector<8x256xf32>, vector<256x4xf32>, vector<8x4xf32> -> vector<8x4xf32>
    %cst_3 = arith.constant 0.000000e+00 : f32
    %3 = vector.broadcast %cst_3 : f32 to vector<8x4xf32>
    %4 = arith.subf %3, %2 : vector<8x4xf32>
    %5 = math.exp %4 : vector<8x4xf32>
    %cst_4 = arith.constant 1.000000e+00 : f32
    %6 = vector.broadcast %cst_4 : f32 to vector<8x4xf32>
    %7 = arith.addf %6, %5 : vector<8x4xf32>
    %cst_5 = arith.constant 1.000000e+00 : f32
    %8 = vector.broadcast %cst_5 : f32 to vector<8x4xf32>
    %9 = arith.divf %8, %7 : vector<8x4xf32>
    %c0_6 = arith.constant 0 : index
    %c0_7 = arith.constant 0 : index
    %10 = vector.load %arg3[%c0_6, %c0_7] : memref<4x8xf32, #tpu.memory_space<vmem>>, vector<4x8xf32>
    %cst_8 = arith.constant dense<0.000000e+00> : vector<8x8xf32>
    %11 = tpu.matmul %9, %10, %cst_8 {dimension_numbers = #tpu.dot_dimension_numbers<[1], [0], [0], [1], [0, 0, 1, 1], [], []>} : vector<8x4xf32>, vector<4x8xf32>, vector<8x8xf32> -> vector<8x8xf32>
    %cst_9 = arith.constant 0.000000e+00 : f32
    %12 = vector.broadcast %cst_9 : f32 to vector<8x8xf32>
    %13 = arith.subf %12, %11 : vector<8x8xf32>
    %14 = math.exp %13 : vector<8x8xf32>
    %cst_10 = arith.constant 1.000000e+00 : f32
    %15 = vector.broadcast %cst_10 : f32 to vector<8x8xf32>
    %16 = arith.addf %15, %14 : vector<8x8xf32>
    %cst_11 = arith.constant 1.000000e+00 : f32
    %17 = vector.broadcast %cst_11 : f32 to vector<8x8xf32>
    %18 = arith.divf %17, %16 : vector<8x8xf32>
    %c0_12 = arith.constant 0 : index
    %c0_13 = arith.constant 0 : index
    %19 = vector.load %arg4[%c0_12, %c0_13] : memref<8x256xf32, #tpu.memory_space<vmem>>, vector<8x256xf32>
    %cst_14 = arith.constant dense<0.000000e+00> : vector<8x256xf32>
    %20 = tpu.matmul %18, %19, %cst_14 {dimension_numbers = #tpu.dot_dimension_numbers<[1], [0], [0], [1], [0, 0, 1, 1], [], []>} : vector<8x8xf32>, vector<8x256xf32>, vector<8x256xf32> -> vector<8x256xf32>
    %21 = arith.mulf %0, %20 : vector<8x256xf32>
    %c0_15 = arith.constant 0 : index
    %c0_16 = arith.constant 0 : index
    %22 = vector.load %arg5[%c0_15, %c0_16] : memref<8x256xf32, #tpu.memory_space<vmem>>, vector<8x256xf32>
    tpu.vector_store %arg5[%c0_15, %c0_16], %21 {strides = array<i32>} : memref<8x256xf32, #tpu.memory_space<vmem>>, vector<8x256xf32>,
    return
  }
  func.func @transform_0(%arg0: i32) -> (i32, i32) {
    %c0_i32 = arith.constant 0 : i32
    %c0_i32_0 = arith.constant 0 : i32
    return %arg0, %c0_i32 : i32, i32
  }
  func.func @transform_1(%arg0: i32) -> (i32, i32) {
    %c0_i32 = arith.constant 0 : i32
    %c0_i32_0 = arith.constant 0 : i32
    %c0_i32_1 = arith.constant 0 : i32
    return %c0_i32, %c0_i32_0 : i32, i32
  }
  func.func @transform_2(%arg0: i32) -> (i32, i32) {
    %c0_i32 = arith.constant 0 : i32
    %c0_i32_0 = arith.constant 0 : i32
    %c0_i32_1 = arith.constant 0 : i32
    return %c0_i32, %c0_i32_0 : i32, i32
  }
  func.func @transform_3(%arg0: i32) -> (i32, i32) {
    %c0_i32 = arith.constant 0 : i32
    %c0_i32_0 = arith.constant 0 : i32
    %c0_i32_1 = arith.constant 0 : i32
    return %c0_i32, %c0_i32_0 : i32, i32
  }
  func.func @transform_4(%arg0: i32) -> (i32, i32) {
    %c0_i32 = arith.constant 0 : i32
    %c0_i32_0 = arith.constant 0 : i32
    return %arg0, %c0_i32 : i32, i32
  }
}

</mosaic_0001>

<llo_original>
// kernel: tpu_custom_call.1
$region0: #{tpu_custom_call.1}
  #allocation0 [shape = 'u32[]', space=smem, size = 0x4, offset = 0x4, fixed_abs, tag = 'smem constant byte address 0x4 - core index']
  #allocation1 [shape = 'u32[72,128]{1,0:T(1,128)}', space=vmem, size = 0x9000, scoped, tag = 'internal scratch']
  %s0 = inlined_call_operand.vmem [shape: f32[8,256], index: 0, kind: input, shape index: {}]
  %s1 = inlined_call_operand.vmem [shape: f32[256,4], index: 1, kind: input, shape index: {}]
  %s2 = inlined_call_operand.vmem [shape: f32[4,8], index: 2, kind: input, shape index: {}]
  %s3 = inlined_call_operand.vmem [shape: f32[8,256], index: 3, kind: input, shape index: {}]
  %s4 = inlined_call_operand.hbm [shape: f32[8,256], index: 4, kind: output, shape index: {}]
  %s5 = sld [smem:[#allocation0]]
  $region26: #{tpu_custom_call.1} parent=0
    _
  %s7 = ssub.s32 1, %s5
  %s8 = scalar_select 0, %s7, %s5
  $region1: #{tpu_custom_call.1} parent=0
    #allocation2 [shape = 'u8[8192]{0}', space=vmem, size = 0x2000, scoped, tag = 'output window, operand 0, single buffered']
    #allocation3 [shape = 's32[1]{0}', space=sflag, size = 0x4, scoped, tag = 'scoped memory for tpu_custom_call.1']
    %9 = vsyncpa [#allocation3], 0
    // Predicated region
    $region2: #{tpu_custom_call.1} parent=1 // pred_check
      _
    $region3: #{tpu_custom_call.1} parent=1 // pred_check_branch
      %11 = sbr.rel (0) target = $region5
    $region4: #{tpu_custom_call.1} parent=1 // pred_region
      _
    $region5: #{tpu_custom_call.1} parent=1 // pred_fallthru
      _
    // Predicated region
    $region6: #{tpu_custom_call.1} parent=1 // pred_check
      _
    $region7: #{tpu_custom_call.1} parent=1 // pred_check_branch
      %13 = sbr.rel (0) target = $region9
    $region8: #{tpu_custom_call.1} parent=1 // pred_region
      _
    $region9: #{tpu_custom_call.1} parent=1 // pred_fallthru
      _
    // Predicated region
    $region10: #{tpu_custom_call.1} parent=1 // pred_check
      _
    $region11: #{tpu_custom_call.1} parent=1 // pred_check_branch
      %15 = sbr.rel (0) target = $region13
    $region12: #{tpu_custom_call.1} parent=1 // pred_region
      _
    $region13: #{tpu_custom_call.1} parent=1 // pred_fallthru
      _
    // Predicated region
    $region14: #{tpu_custom_call.1} parent=1 // pred_check
      _
    $region15: #{tpu_custom_call.1} parent=1 // pred_check_branch
      %17 = sbr.rel (0) target = $region17
    $region16: #{tpu_custom_call.1} parent=1 // pred_region
      _
    $region17: #{tpu_custom_call.1} parent=1 // pred_fallthru
      _
    %v18 = vld [vmem:[%s0] sm:$0xff]
    %v19 = vld [vmem:[%s0 + $0x8] sm:$0xff]
    %v20 = vld [vmem:[%s1] sm:$0xff]
    %v21 = vld [vmem:[%s1 + $0x8] sm:$0xff]
    %v22 = vld [vmem:[%s1 + $0x10] sm:$0xff]
    %v23 = vld [vmem:[%s1 + $0x18] sm:$0xff]
    %v24 = vld [vmem:[%s1 + $0x20] sm:$0xff]
    %v25 = vld [vmem:[%s1 + $0x28] sm:$0xff]
    %v26 = vld [vmem:[%s1 + $0x30] sm:$0xff]
    %v27 = vld [vmem:[%s1 + $0x38] sm:$0xff]
    %v28 = vld [vmem:[%s1 + $0x40] sm:$0xff]
    %v29 = vld [vmem:[%s1 + $0x48] sm:$0xff]
    %v30 = vld [vmem:[%s1 + $0x50] sm:$0xff]
    %v31 = vld [vmem:[%s1 + $0x58] sm:$0xff]
    %v32 = vld [vmem:[%s1 + $0x60] sm:$0xff]
    %v33 = vld [vmem:[%s1 + $0x68] sm:$0xff]
    %v34 = vld [vmem:[%s1 + $0x70] sm:$0xff]
    %v35 = vld [vmem:[%s1 + $0x78] sm:$0xff]
    %v36 = vld [vmem:[%s1 + $0x80] sm:$0xff]
    %v37 = vld [vmem:[%s1 + $0x88] sm:$0xff]
    %v38 = vld [vmem:[%s1 + $0x90] sm:$0xff]
    %v39 = vld [vmem:[%s1 + $0x98] sm:$0xff]
    %v40 = vld [vmem:[%s1 + $0xa0] sm:$0xff]
    %v41 = vld [vmem:[%s1 + $0xa8] sm:$0xff]
    %v42 = vld [vmem:[%s1 + $0xb0] sm:$0xff]
    %v43 = vld [vmem:[%s1 + $0xb8] sm:$0xff]
    %v44 = vld [vmem:[%s1 + $0xc0] sm:$0xff]
    %v45 = vld [vmem:[%s1 + $0xc8] sm:$0xff]
    %v46 = vld [vmem:[%s1 + $0xd0] sm:$0xff]
    %v47 = vld [vmem:[%s1 + $0xd8] sm:$0xff]
    %v48 = vld [vmem:[%s1 + $0xe0] sm:$0xff]
    %v49 = vld [vmem:[%s1 + $0xe8] sm:$0xff]
    %v50 = vld [vmem:[%s1 + $0xf0] sm:$0xff]
    %v51 = vld [vmem:[%s1 + $0xf8] sm:$0xff]
    %52 = vmatpush.msra.mxu0 %v35
    %53 = vmatpush.msra.mxu0 %v34
    %54 = vmatpush.msra.mxu0 %v33
    %55 = vmatpush.msra.mxu0 %v32
    %56 = vmatpush.msra.mxu0 %v31
    %57 = vmatpush.msra.mxu0 %v30
    %58 = vmatpush.msra.mxu0 %v29
    %59 = vmatpush.msra.mxu0 %v28
    %60 = vmatpush.msra.mxu0 %v27
    %61 = vmatpush.msra.mxu0 %v26
    %62 = vmatpush.msra.mxu0 %v25
    %63 = vmatpush.msra.mxu0 %v24
    %64 = vmatpush.msra.mxu0 %v23
    %65 = vmatpush.msra.mxu0 %v22
    %66 = vmatpush.msra.mxu0 %v21
    %67 = vmatpush.msra.mxu0 %v20
    %68 = vmatmul.f32.gmra.mxu0 %v18
    %v69 = vpop.f32.mrf.mxu0
    %v70 = vadd.f32 0.0, %v69
    %71 = vdwg.mxu0
    %72 = vmatpush.msra.mxu0 %v51
    %73 = vmatpush.msra.mxu0 %v50
    %74 = vmatpush.msra.mxu0 %v49
    %75 = vmatpush.msra.mxu0 %v48
    %76 = vmatpush.msra.mxu0 %v47
    %77 = vmatpush.msra.mxu0 %v46
    %78 = vmatpush.msra.mxu0 %v45
    %79 = vmatpush.msra.mxu0 %v44
    %80 = vmatpush.msra.mxu0 %v43
    %81 = vmatpush.msra.mxu0 %v42
    %82 = vmatpush.msra.mxu0 %v41
    %83 = vmatpush.msra.mxu0 %v40
    %84 = vmatpush.msra.mxu0 %v39
    %85 = vmatpush.msra.mxu0 %v38
    %86 = vmatpush.msra.mxu0 %v37
    %87 = vmatpush.msra.mxu0 %v36
    %88 = vmatmul.f32.gmra.mxu0 %v19
    %v89 = vpop.f32.mrf.mxu0
    %v90 = vadd.f32 %v70, %v89
    %91 = vdwg.mxu0
    %v92 = vsub.f32 0.0, %v90
    %v93 = vmul.f32 %v92, 1.442695
    %v94 = vpow.pop %v93
    %v95 = vadd.f32 %v94, 1.0
    %v96 = vrcp.pop %v95
    %v97 = vmul.f32 %v95, %v96
    %v98 = vsub.f32 1.0, %v97
    %v99 = vmul.f32 %v96, %v98
    %v100 = vadd.f32 %v96, %v99
    %vm101 = vweird.f32 %v95
    %vm102 = vweird.f32 %v96
    %vm103 = vmor %vm101, %vm102
    %v104 = vsel %vm103, %v96, %v100
    %v105 = vand.u32 2147483647, %v95
    %vm106 = vcmp.eq.f32.partialorder %v105, 8.507059e+37
    %v107 = vand.u32 %v95, 2147483648
    %v108 = vor.u32 1.1754944e-38, %v107
    %v109 = vsel %vm106, %v108, %v104
    %v110 = vmul.f32 1.0, %v109
    %v111 = vld [vmem:[%s2] sm:$0xf]
    %vm112 = vcmask 31744
    %v114 = vsel %vm112, %v110, 0
    %vm116 = vcmask 1043456
    %v118 = vsel %vm116, %v111, 0
    %120 = vmatpush.msra.mxu0 0.0
    %121 = vmatpush.msra.mxu0 0.0
    %122 = vmatpush.msra.mxu0 0.0
    %123 = vmatpush.msra.mxu0 0.0
    %124 = vmatpush.msra.mxu0 0.0
    %125 = vmatpush.msra.mxu0 0.0
    %126 = vmatpush.msra.mxu0 0.0
    %127 = vmatpush.msra.mxu0 0.0
    %128 = vmatpush.msra.mxu0 0.0
    %129 = vmatpush.msra.mxu0 0.0
    %130 = vmatpush.msra.mxu0 0.0
    %131 = vmatpush.msra.mxu0 0.0
    %132 = vmatpush.msra.mxu0 0.0
    %133 = vmatpush.msra.mxu0 0.0
    %134 = vmatpush.msra.mxu0 0.0
    %135 = vmatpush.msra.mxu0 %v118
    %136 = vmatmul.f32.gmra.mxu0 %v114
    %v137 = vpop.f32.mrf.mxu0
    %v138 = vadd.f32 0.0, %v137
    %139 = vdwg.mxu0
    %v140 = vsub.f32 0.0, %v138
    %v141 = vmul.f32 %v140, 1.442695
    %v142 = vpow.pop %v141
    %v143 = vadd.f32 %v142, 1.0
    %v144 = vrcp.pop %v143
    %v145 = vmul.f32 %v143, %v144
    %v146 = vsub.f32 1.0, %v145
    %v147 = vmul.f32 %v144, %v146
    %v148 = vadd.f32 %v144, %v147
    %vm149 = vweird.f32 %v143
    %vm150 = vweird.f32 %v144
    %vm151 = vmor %vm149, %vm150
    %v152 = vsel %vm151, %v144, %v148
    %v153 = vand.u32 2147483647, %v143
    %vm154 = vcmp.eq.f32.partialorder %v153, 8.507059e+37
    %v155 = vand.u32 %v143, 2147483648
    %v156 = vor.u32 1.1754944e-38, %v155
    %v157 = vsel %vm154, %v156, %v152
    %v158 = vmul.f32 1.0, %v157
    %v159 = vld [vmem:[%s3] sm:$0xff]
    %v160 = vld [vmem:[%s3 + $0x8] sm:$0xff]
    %vm161 = vcmask 64512
    %v163 = vsel %vm161, %v158, 0
    %165 = vmatpush.msra.mxu0 0.0
    %166 = vmatpush.msra.mxu0 0.0
    %167 = vmatpush.msra.mxu0 0.0
    %168 = vmatpush.msra.mxu0 0.0
    %169 = vmatpush.msra.mxu0 0.0
    %170 = vmatpush.msra.mxu0 0.0
    %171 = vmatpush.msra.mxu0 0.0
    %172 = vmatpush.msra.mxu0 0.0
    %173 = vmatpush.msra.mxu0 0.0
    %174 = vmatpush.msra.mxu0 0.0
    %175 = vmatpush.msra.mxu0 0.0
    %176 = vmatpush.msra.mxu0 0.0
    %177 = vmatpush.msra.mxu0 0.0
    %178 = vmatpush.msra.mxu0 0.0
    %179 = vmatpush.msra.mxu0 0.0
    %180 = vmatpush.msra.mxu0 %v159
    %181 = vmatmul.f32.gmra.mxu0 %v163
    %v182 = vpop.f32.mrf.mxu0
    %v183 = vadd.f32 0.0, %v182
    %184 = vdwg.mxu0
    %185 = vmatpush.msra.mxu0 0.0
    %186 = vmatpush.msra.mxu0 0.0
    %187 = vmatpush.msra.mxu0 0.0
    %188 = vmatpush.msra.mxu0 0.0
    %189 = vmatpush.msra.mxu0 0.0
    %190 = vmatpush.msra.mxu0 0.0
    %191 = vmatpush.msra.mxu0 0.0
    %192 = vmatpush.msra.mxu0 0.0
    %193 = vmatpush.msra.mxu0 0.0
    %194 = vmatpush.msra.mxu0 0.0
    %195 = vmatpush.msra.mxu0 0.0
    %196 = vmatpush.msra.mxu0 0.0
    %197 = vmatpush.msra.mxu0 0.0
    %198 = vmatpush.msra.mxu0 0.0
    %199 = vmatpush.msra.mxu0 0.0
    %200 = vmatpush.msra.mxu0 %v160
    %201 = vmatmul.f32.gmra.mxu0 %v163
    %v202 = vpop.f32.mrf.mxu0
    %v203 = vadd.f32 0.0, %v202
    %204 = vdwg.mxu0
    %v205 = vmul.f32 %v18, %v183
    %v206 = vmul.f32 %v19, %v203
    %207 = vst [vmem:[#allocation2] sm:$0xff] %v205
    %208 = vst [vmem:[#allocation2 + $0x8] sm:$0xff] %v206
    // Predicated region
    $region18: #{tpu_custom_call.1} parent=1 // pred_check
      _
    $region19: #{tpu_custom_call.1} parent=1 // pred_check_branch
      %210 = sbr.rel (0) target = $region21
    $region20: #{tpu_custom_call.1} parent=1 // pred_region
      %212 = vsyncadd [#allocation3], 0
      %s214 = sshll.u32 [#allocation2], 4
      %s215 = int_to_ptr.vmem [resolvable:$true] %s214
      %s216 = sshll.u32 %s4, 4
      %s217 = int_to_ptr.hbm [resolvable:$true] %s216
      %219 = dma.vmem_to_hbm [thread:$0]  %s215, 256, %s217, [#allocation3]
    $region21: #{tpu_custom_call.1} parent=1 // pred_fallthru
      _
    // Predicated region
    $region22: #{tpu_custom_call.1} parent=1 // pred_check
      _
    $region23: #{tpu_custom_call.1} parent=1 // pred_check_branch
      %221 = sbr.rel (0) target = $region25
    $region24: #{tpu_custom_call.1} parent=1 // pred_region
      %223 = dma.done [#allocation3], 256
    $region25: #{tpu_custom_call.1} parent=1 // pred_fallthru
      _
    %224 = vsyncpa [#allocation3], 1

</llo_original>
